<compile_context>
chip_gen: v6e
topology: v6e:2x2x1
jax: 0.10.0
libtpu: 0.0.40
codegen_flags: <defaults>
</compile_context>

<pallas_src>
import jax
import jax.numpy as jnp
import numpy as np
from jax.experimental import pallas as pl
from jax.experimental.pallas import tpu as pltpu

K = 8                      # kernels=[8, 8]
L = 128                    # sequence length
PAD_L = (K - 1) // 2       # Conv1dSamePadding, stride=1: left pad 3, right pad 4
REF_ROW = 8                # sublane row where the averaged-reference channels start
GUARD = 128                # one zero lane-tile each side => aligned stores + free pad
SCR_W = GUARD + L + GUARD  # 384


def fused_fcn_kernel(xd_ref, xr_ref, w1_ref, b1_ref, w2_ref, b2_ref,
                     wf_ref, bf_ref, o_ref, scr_ref):
    """Full forward for one batch row.

    xd_ref : (C_dat, L)      data channels (channel-major)
    xr_ref : (R, C_ref, L)   reference channels (averaged over R in-kernel)
    w1_ref : (C1, K*ROWS)    layer-1 BN-folded weight, im2col layout (col=t*ROWS+row)
    w2_ref : (C2, K*ROWS)    layer-2 BN-folded weight, im2col layout
    b1/b2  : (C, 1)          BN-folded biases;  wf_ref: (OUT, C2), bf_ref: (OUT, 1)
    o_ref  : (OUT, 1)
    scr_ref: (ROWS, SCR_W)   VMEM scratch. Lanes [GUARD, GUARD+L) hold the live
             signal; the flanking zero lane-tiles realize the "same" padding.
    """
    cd = xd_ref.shape[0]
    cr = xr_ref.shape[1]
    c1 = w1_ref.shape[0]

    # Glue (mean over refs, channel concat, zero pad) done via scratch writes.
    # Full re-zero each step keeps the guards correct even when the grid is
    # split across TensorCores (each core owns its own scratch); it is only
    # ~6 vregs of stores per step.
    scr_ref[...] = jnp.zeros_like(scr_ref)
    scr_ref[0:cd, GUARD:GUARD + L] = xd_ref[...]
    scr_ref[REF_ROW:REF_ROW + cr, GUARD:GUARD + L] = jnp.mean(xr_ref[...], axis=0)

    def conv_bn_relu(w_ref, b_ref):
        # im2col: stack the K taps along the contraction axis -> one MXU matmul.
        xp = scr_ref[...]                                     # (ROWS, SCR_W)
        m = jnp.concatenate(
            [xp[:, GUARD - PAD_L + t: GUARD - PAD_L + t + L] for t in range(K)],
            axis=0)                                           # (K*ROWS, L)
        h = jnp.dot(w_ref[...], m, preferred_element_type=jnp.float32)
        return jnp.maximum(h + b_ref[...], 0.0)               # (C_out, L)

    h1 = conv_bn_relu(w1_ref, b1_ref)                         # (C1, L)
    scr_ref[0:c1, GUARD:GUARD + L] = h1                       # re-pad layer-2 input
    h2 = conv_bn_relu(w2_ref, b2_ref)                         # (C2, L)

    # Head: Linear(mean(h2, -1)) == mean(Linear per position); dot-then-mean
    # keeps the matmul lane-dense; the 1/L mean is a cheap lane reduction.
    g = jnp.dot(wf_ref[...], h2, preferred_element_type=jnp.float32)   # (OUT, L)
    o_ref[...] = jnp.mean(g, axis=1, keepdims=True) + bf_ref[...]


def custom_model_no_align(x_dat, x_ref, kparams):
    """x_dat: (B, L, C_dat); x_ref: (B, R, L, C_ref). Returns (y, None, None)."""
    B, Lx, c_dat = x_dat.shape
    _, R, _, c_ref = x_ref.shape
    w1m, b1, w2m, b2, wf, bf = kparams
    c1, c2, out_c = w1m.shape[0], w2m.shape[0], wf.shape[0]
    rows = w1m.shape[1] // K                 # scratch sublane budget (multiple of 8)
    assert Lx == L and c_dat <= REF_ROW and c_ref <= 8
    assert rows >= REF_ROW + c_ref and rows >= c1 and rows % 8 == 0

    # Layout-only glue: put channels on sublanes / length on lanes.
    xd_t = jnp.swapaxes(x_dat, 1, 2)        # (B, C_dat, L)
    xr_t = jnp.swapaxes(x_ref, 2, 3)        # (B, R, C_ref, L)

    y3 = pl.pallas_call(
        fused_fcn_kernel,
        out_shape=jax.ShapeDtypeStruct((B, out_c, 1), jnp.float32),
        grid_spec=pltpu.PrefetchScalarGridSpec(
            num_scalar_prefetch=0,
            grid=(B,),
            in_specs=[
                pl.BlockSpec((None, c_dat, L), lambda b: (b, 0, 0)),
                pl.BlockSpec((None, R, c_ref, L), lambda b: (b, 0, 0, 0)),
                pl.BlockSpec((c1, K * rows), lambda b: (0, 0)),
                pl.BlockSpec((c1, 1), lambda b: (0, 0)),
                pl.BlockSpec((c2, K * rows), lambda b: (0, 0)),
                pl.BlockSpec((c2, 1), lambda b: (0, 0)),
                pl.BlockSpec((out_c, c2), lambda b: (0, 0)),
                pl.BlockSpec((out_c, 1), lambda b: (0, 0)),
            ],
            out_specs=pl.BlockSpec((None, out_c, 1), lambda b: (b, 0, 0)),
            scratch_shapes=[pltpu.VMEM((rows, SCR_W), jnp.float32)],
        ),
        compiler_params=pltpu.CompilerParams(
            # batch rows are independent -> v7x's two TensorCores split the grid
            dimension_semantics=("parallel",)),
    )(xd_t, xr_t, w1m, b1, w2m, b2, wf, bf)
    return (y3[:, :, 0], None, None)


def init_params(key, in_channels, out_channels, channels, kernels):
    """Deterministic params; BatchNorm1d (eval) folded into conv weight/bias."""
    chs = [in_channels] + list(channels)
    convs = []
    for i, k in enumerate(kernels):
        key, k1, k2, k3, k4, k5, k6 = jax.random.split(key, 7)
        c_in, c_out = chs[i], chs[i + 1]
        bound = 1.0 / np.sqrt(c_in * k)
        w = jax.random.uniform(k1, (c_out, c_in, k), jnp.float32, -bound, bound)
        b = jax.random.uniform(k2, (c_out,), jnp.float32, -bound, bound)
        gamma = jax.random.uniform(k3, (c_out,), jnp.float32, 0.5, 1.5)
        beta = 0.1 * jax.random.normal(k4, (c_out,), jnp.float32)
        r_mean = 0.1 * jax.random.normal(k5, (c_out,), jnp.float32)
        r_var = jax.random.uniform(k6, (c_out,), jnp.float32, 0.5, 1.5)
        scale = gamma / jnp.sqrt(r_var + 1e-5)
        convs.append((w * scale[:, None, None], (b - r_mean) * scale + beta))
    key, kf1, kf2 = jax.random.split(key, 3)
    bound = 1.0 / np.sqrt(chs[-1])
    wf = jax.random.uniform(kf1, (out_channels, chs[-1]), jnp.float32, -bound, bound)
    bf = jax.random.uniform(kf2, (out_channels,), jnp.float32, -bound, bound)
    return convs, (wf, bf)


def prep_kernel_params(convs, head, c_dat, c_ref):
    """Convert folded conv weights (C_out, C_in, K) to im2col layout (C_out, K*ROWS).

    Scratch row map: data channels at rows [0, c_dat), averaged reference channels
    at rows [REF_ROW, REF_ROW + c_ref) for layer 1; layer-1 activations occupy
    rows [0, C1) for layer 2. Unused rows get zero weight columns.
    """
    (w1, b1), (w2, b2) = convs
    c1, c2 = w1.shape[0], w2.shape[0]
    rows = int(np.maximum(REF_ROW + c_ref, c1))
    rows = ((rows + 7) // 8) * 8                      # sublane multiple of 8
    # layer 1
    wp1 = jnp.zeros((c1, rows, K), jnp.float32)
    wp1 = wp1.at[:, 0:c_dat, :].set(w1[:, 0:c_dat, :])
    wp1 = wp1.at[:, REF_ROW:REF_ROW + c_ref, :].set(w1[:, c_dat:c_dat + c_ref, :])
    w1_mat = jnp.transpose(wp1, (0, 2, 1)).reshape(c1, K * rows)
    # layer 2
    wp2 = jnp.zeros((c2, rows, K), jnp.float32)
    wp2 = wp2.at[:, 0:c1, :].set(w2)
    w2_mat = jnp.transpose(wp2, (0, 2, 1)).reshape(c2, K * rows)
    wf, bf = head
    return (w1_mat, b1[:, None], w2_mat, b2[:, None], wf, bf[:, None])
    # TODO(synk): stride>1 same-padding not implemented (config uses strides=[1,1]).


def reference_forward(x_dat, x_ref, convs, head):
    """Pure-JAX reference with identical semantics to the PyTorch module."""
    x = jnp.swapaxes(jnp.concatenate([x_dat, jnp.mean(x_ref, axis=1)], axis=2), 2, 1)
    for w, b in convs:
        k = w.shape[2]
        Lx = x.shape[2]
        pad_l = (k - 1) // 2
        xp = jnp.pad(x, ((0, 0), (0, 0), (pad_l, (k - 1) - pad_l)))
        acc = jnp.zeros((x.shape[0], w.shape[0], Lx), jnp.float32)
        for t in range(k):
            acc = acc + jnp.einsum("oc,bcl->bol", w[:, :, t], xp[:, :, t:t + Lx])
        x = jnp.maximum(acc + b[None, :, None], 0.0)
    wf, bf = head
    return jnp.mean(x, axis=-1) @ wf.T + bf[None, :]


if __name__ == "__main__":
    B, R = 2, 3
    C_DAT, C_REF = 2, 2
    params_classification = dict(
        in_channels=C_DAT + C_REF, out_channels=8,
        channels=[16, 16], kernels=[K, K], strides=[1, 1])

    key = jax.random.PRNGKey(0)
    key, kp, kd, kr = jax.random.split(key, 4)
    convs, head = init_params(
        kp, params_classification["in_channels"],
        params_classification["out_channels"],
        params_classification["channels"],
        params_classification["kernels"])
    kparams = prep_kernel_params(convs, head, C_DAT, C_REF)

    x_dat = jax.random.normal(kd, (B, L, C_DAT), jnp.float32)
    x_ref = jax.random.normal(kr, (B, R, L, C_REF), jnp.float32)

    fwd = jax.jit(custom_model_no_align)
    y, _, _ = fwd(x_dat, x_ref, kparams)
    y = jax.block_until_ready(y)

    y_ref = reference_forward(x_dat, x_ref, convs, head)
    assert y.shape == (B, params_classification["out_channels"])
    np.testing.assert_allclose(np.asarray(y), np.asarray(y_ref),
                               rtol=1e-3, atol=1e-3)
    print("KERNEL_OK")
</pallas_src>

<mosaic_0001>
module attributes {stable_mosaic.version = 11 : i64} {
  func.func @fused_fcn_kernel(%arg0: i32, %arg1: memref<1x2x128xf32, #tpu.memory_space<vmem>>, %arg2: memref<1x3x2x128xf32, #tpu.memory_space<vmem>>, %arg3: memref<16x128xf32, #tpu.memory_space<vmem>>, %arg4: memref<16x1xf32, #tpu.memory_space<vmem>>, %arg5: memref<16x128xf32, #tpu.memory_space<vmem>>, %arg6: memref<16x1xf32, #tpu.memory_space<vmem>>, %arg7: memref<8x16xf32, #tpu.memory_space<vmem>>, %arg8: memref<8x1xf32, #tpu.memory_space<vmem>>, %arg9: memref<1x8x1xf32, #tpu.memory_space<vmem>>, %arg10: memref<16x384xf32, #tpu.memory_space<vmem>>) attributes {dimension_semantics = [#tpu.dimension_semantics<parallel>], iteration_bounds = array<i64: 2>, scalar_prefetch = 0 : i64, scratch_operands = 1 : i64, tpu.core_type = #tpu.core_type<tc>, window_params = [{transform_indices = @transform_0, window_bounds = array<i64: 1, 2, 128>}, {transform_indices = @transform_1, window_bounds = array<i64: 1, 3, 2, 128>}, {pipeline_mode = #tpu.pipeline_mode<synchronous>, transform_indices = @transform_2, window_bounds = array<i64: 16, 128>}, {pipeline_mode = #tpu.pipeline_mode<synchronous>, transform_indices = @transform_3, window_bounds = array<i64: 16, 1>}, {pipeline_mode = #tpu.pipeline_mode<synchronous>, transform_indices = @transform_4, window_bounds = array<i64: 16, 128>}, {pipeline_mode = #tpu.pipeline_mode<synchronous>, transform_indices = @transform_5, window_bounds = array<i64: 16, 1>}, {pipeline_mode = #tpu.pipeline_mode<synchronous>, transform_indices = @transform_6, window_bounds = array<i64: 8, 16>}, {pipeline_mode = #tpu.pipeline_mode<synchronous>, transform_indices = @transform_7, window_bounds = array<i64: 8, 1>}, {transform_indices = @transform_8, window_bounds = array<i64: 1, 8, 1>}]} {
    %cst = arith.constant 0.000000e+00 : f32
    %0 = vector.broadcast %cst : f32 to vector<16x384xf32>
    %c0 = arith.constant 0 : index
    %c0_0 = arith.constant 0 : index
    %1 = vector.load %arg10[%c0, %c0_0] : memref<16x384xf32, #tpu.memory_space<vmem>>, vector<16x384xf32>
    tpu.vector_store %arg10[%c0, %c0_0], %0 {strides = array<i32>} : memref<16x384xf32, #tpu.memory_space<vmem>>, vector<16x384xf32>,
    %c0_1 = arith.constant 0 : index
    %c0_2 = arith.constant 0 : index
    %c0_3 = arith.constant 0 : index
    %2 = vector.load %arg1[%c0_1, %c0_2, %c0_3] : memref<1x2x128xf32, #tpu.memory_space<vmem>>, vector<1x2x128xf32>
    %3 = vector.shape_cast %2 : vector<1x2x128xf32> to vector<2x128xf32>
    %c0_4 = arith.constant 0 : index
    %c128 = arith.constant 128 : index
    %4 = vector.load %arg10[%c0_4, %c128] : memref<16x384xf32, #tpu.memory_space<vmem>>, vector<2x128xf32>
    tpu.vector_store %arg10[%c0_4, %c128], %3 {strides = array<i32>} : memref<16x384xf32, #tpu.memory_space<vmem>>, vector<2x128xf32>,
    %c0_5 = arith.constant 0 : index
    %c0_6 = arith.constant 0 : index
    %c0_7 = arith.constant 0 : index
    %c0_8 = arith.constant 0 : index
    %5 = vector.load %arg2[%c0_5, %c0_6, %c0_7, %c0_8] : memref<1x3x2x128xf32, #tpu.memory_space<vmem>>, vector<1x3x2x128xf32>
    %6 = vector.shape_cast %5 : vector<1x3x2x128xf32> to vector<3x2x128xf32>
    %cst_9 = arith.constant dense<0.000000e+00> : vector<2x128xf32>
    %7 = vector.multi_reduction <add>, %6, %cst_9 [0] : vector<3x2x128xf32> to vector<2x128xf32>
    %cst_10 = arith.constant 3.000000e+00 : f32
    %8 = vector.broadcast %cst_10 : f32 to vector<2x128xf32>
    %9 = arith.divf %7, %8 : vector<2x128xf32>
    %c8 = arith.constant 8 : index
    %c128_11 = arith.constant 128 : index
    %10 = vector.load %arg10[%c8, %c128_11] : memref<16x384xf32, #tpu.memory_space<vmem>>, vector<2x128xf32>
    tpu.vector_store %arg10[%c8, %c128_11], %9 {strides = array<i32>} : memref<16x384xf32, #tpu.memory_space<vmem>>, vector<2x128xf32>,
    %c0_12 = arith.constant 0 : index
    %c0_13 = arith.constant 0 : index
    %11 = vector.load %arg10[%c0_12, %c0_13] : memref<16x384xf32, #tpu.memory_space<vmem>>, vector<16x384xf32>
    %12 = vector.extract_strided_slice %11 {offsets = [0, 125], sizes = [16, 128], strides = [1, 1]} : vector<16x384xf32> to vector<16x128xf32>
    %13 = vector.extract_strided_slice %11 {offsets = [0, 126], sizes = [16, 128], strides = [1, 1]} : vector<16x384xf32> to vector<16x128xf32>
    %14 = vector.extract_strided_slice %11 {offsets = [0, 127], sizes = [16, 128], strides = [1, 1]} : vector<16x384xf32> to vector<16x128xf32>
    %15 = vector.extract_strided_slice %11 {offsets = [0, 128], sizes = [16, 128], strides = [1, 1]} : vector<16x384xf32> to vector<16x128xf32>
    %16 = vector.extract_strided_slice %11 {offsets = [0, 129], sizes = [16, 128], strides = [1, 1]} : vector<16x384xf32> to vector<16x128xf32>
    %17 = vector.extract_strided_slice %11 {offsets = [0, 130], sizes = [16, 128], strides = [1, 1]} : vector<16x384xf32> to vector<16x128xf32>
    %18 = vector.extract_strided_slice %11 {offsets = [0, 131], sizes = [16, 128], strides = [1, 1]} : vector<16x384xf32> to vector<16x128xf32>
    %19 = vector.extract_strided_slice %11 {offsets = [0, 132], sizes = [16, 128], strides = [1, 1]} : vector<16x384xf32> to vector<16x128xf32>
    %20 = tpu.concatenate %12, %13, %14, %15, %16, %17, %18, %19 in 0 : vector<16x128xf32>, vector<16x128xf32>, vector<16x128xf32>, vector<16x128xf32>, vector<16x128xf32>, vector<16x128xf32>, vector<16x128xf32>, vector<16x128xf32> -> vector<128x128xf32>
    %c0_14 = arith.constant 0 : index
    %c0_15 = arith.constant 0 : index
    %21 = vector.load %arg3[%c0_14, %c0_15] : memref<16x128xf32, #tpu.memory_space<vmem>>, vector<16x128xf32>
    %cst_16 = arith.constant dense<0.000000e+00> : vector<16x128xf32>
    %22 = tpu.matmul %21, %20, %cst_16 {dimension_numbers = #tpu.dot_dimension_numbers<[1], [0], [0], [1], [0, 0, 1, 1], [], []>} : vector<16x128xf32>, vector<128x128xf32>, vector<16x128xf32> -> vector<16x128xf32>
    %c0_17 = arith.constant 0 : index
    %c0_18 = arith.constant 0 : index
    %23 = vector.load %arg4[%c0_17, %c0_18] : memref<16x1xf32, #tpu.memory_space<vmem>>, vector<16x1xf32>
    %24 = vector.broadcast %23 : vector<16x1xf32> to vector<16x128xf32>
    %25 = arith.addf %22, %24 : vector<16x128xf32>
    %cst_19 = arith.constant 0.000000e+00 : f32
    %26 = vector.broadcast %cst_19 : f32 to vector<16x128xf32>
    %27 = arith.maximumf %25, %26 : vector<16x128xf32>
    %c0_20 = arith.constant 0 : index
    %c128_21 = arith.constant 128 : index
    %28 = vector.load %arg10[%c0_20, %c128_21] : memref<16x384xf32, #tpu.memory_space<vmem>>, vector<16x128xf32>
    tpu.vector_store %arg10[%c0_20, %c128_21], %27 {strides = array<i32>} : memref<16x384xf32, #tpu.memory_space<vmem>>, vector<16x128xf32>,
    %c0_22 = arith.constant 0 : index
    %c0_23 = arith.constant 0 : index
    %29 = vector.load %arg10[%c0_22, %c0_23] : memref<16x384xf32, #tpu.memory_space<vmem>>, vector<16x384xf32>
    %30 = vector.extract_strided_slice %29 {offsets = [0, 125], sizes = [16, 128], strides = [1, 1]} : vector<16x384xf32> to vector<16x128xf32>
    %31 = vector.extract_strided_slice %29 {offsets = [0, 126], sizes = [16, 128], strides = [1, 1]} : vector<16x384xf32> to vector<16x128xf32>
    %32 = vector.extract_strided_slice %29 {offsets = [0, 127], sizes = [16, 128], strides = [1, 1]} : vector<16x384xf32> to vector<16x128xf32>
    %33 = vector.extract_strided_slice %29 {offsets = [0, 128], sizes = [16, 128], strides = [1, 1]} : vector<16x384xf32> to vector<16x128xf32>
    %34 = vector.extract_strided_slice %29 {offsets = [0, 129], sizes = [16, 128], strides = [1, 1]} : vector<16x384xf32> to vector<16x128xf32>
    %35 = vector.extract_strided_slice %29 {offsets = [0, 130], sizes = [16, 128], strides = [1, 1]} : vector<16x384xf32> to vector<16x128xf32>
    %36 = vector.extract_strided_slice %29 {offsets = [0, 131], sizes = [16, 128], strides = [1, 1]} : vector<16x384xf32> to vector<16x128xf32>
    %37 = vector.extract_strided_slice %29 {offsets = [0, 132], sizes = [16, 128], strides = [1, 1]} : vector<16x384xf32> to vector<16x128xf32>
    %38 = tpu.concatenate %30, %31, %32, %33, %34, %35, %36, %37 in 0 : vector<16x128xf32>, vector<16x128xf32>, vector<16x128xf32>, vector<16x128xf32>, vector<16x128xf32>, vector<16x128xf32>, vector<16x128xf32>, vector<16x128xf32> -> vector<128x128xf32>
    %c0_24 = arith.constant 0 : index
    %c0_25 = arith.constant 0 : index
    %39 = vector.load %arg5[%c0_24, %c0_25] : memref<16x128xf32, #tpu.memory_space<vmem>>, vector<16x128xf32>
    %cst_26 = arith.constant dense<0.000000e+00> : vector<16x128xf32>
    %40 = tpu.matmul %39, %38, %cst_26 {dimension_numbers = #tpu.dot_dimension_numbers<[1], [0], [0], [1], [0, 0, 1, 1], [], []>} : vector<16x128xf32>, vector<128x128xf32>, vector<16x128xf32> -> vector<16x128xf32>
    %c0_27 = arith.constant 0 : index
    %c0_28 = arith.constant 0 : index
    %41 = vector.load %arg6[%c0_27, %c0_28] : memref<16x1xf32, #tpu.memory_space<vmem>>, vector<16x1xf32>
    %42 = vector.broadcast %41 : vector<16x1xf32> to vector<16x128xf32>
    %43 = arith.addf %40, %42 : vector<16x128xf32>
    %cst_29 = arith.constant 0.000000e+00 : f32
    %44 = vector.broadcast %cst_29 : f32 to vector<16x128xf32>
    %45 = arith.maximumf %43, %44 : vector<16x128xf32>
    %c0_30 = arith.constant 0 : index
    %c0_31 = arith.constant 0 : index
    %46 = vector.load %arg7[%c0_30, %c0_31] : memref<8x16xf32, #tpu.memory_space<vmem>>, vector<8x16xf32>
    %cst_32 = arith.constant dense<0.000000e+00> : vector<8x128xf32>
    %47 = tpu.matmul %46, %45, %cst_32 {dimension_numbers = #tpu.dot_dimension_numbers<[1], [0], [0], [1], [0, 0, 1, 1], [], []>} : vector<8x16xf32>, vector<16x128xf32>, vector<8x128xf32> -> vector<8x128xf32>
    %cst_33 = arith.constant dense<0.000000e+00> : vector<8xf32>
    %48 = vector.multi_reduction <add>, %47, %cst_33 [1] : vector<8x128xf32> to vector<8xf32>
    %49 = vector.shape_cast %48 : vector<8xf32> to vector<8x1xf32>
    %cst_34 = arith.constant 1.280000e+02 : f32
    %50 = vector.broadcast %cst_34 : f32 to vector<8x1xf32>
    %51 = arith.divf %49, %50 : vector<8x1xf32>
    %c0_35 = arith.constant 0 : index
    %c0_36 = arith.constant 0 : index
    %52 = vector.load %arg8[%c0_35, %c0_36] : memref<8x1xf32, #tpu.memory_space<vmem>>, vector<8x1xf32>
    %53 = arith.addf %51, %52 : vector<8x1xf32>
    %c0_37 = arith.constant 0 : index
    %c0_38 = arith.constant 0 : index
    %c0_39 = arith.constant 0 : index
    %54 = vector.load %arg9[%c0_37, %c0_38, %c0_39] : memref<1x8x1xf32, #tpu.memory_space<vmem>>, vector<1x8x1xf32>
    %55 = vector.shape_cast %54 : vector<1x8x1xf32> to vector<8x1xf32>
    %56 = vector.shape_cast %53 : vector<8x1xf32> to vector<1x8x1xf32>
    tpu.vector_store %arg9[%c0_37, %c0_38, %c0_39], %56 {strides = array<i32>} : memref<1x8x1xf32, #tpu.memory_space<vmem>>, vector<1x8x1xf32>,
    return
  }
  func.func @transform_0(%arg0: i32) -> (i32, i32, i32) {
    %c0_i32 = arith.constant 0 : i32
    %c0_i32_0 = arith.constant 0 : i32
    %c0_i32_1 = arith.constant 0 : i32
    return %arg0, %c0_i32, %c0_i32_0 : i32, i32, i32
  }
  func.func @transform_1(%arg0: i32) -> (i32, i32, i32, i32) {
    %c0_i32 = arith.constant 0 : i32
    %c0_i32_0 = arith.constant 0 : i32
    %c0_i32_1 = arith.constant 0 : i32
    %c0_i32_2 = arith.constant 0 : i32
    return %arg0, %c0_i32, %c0_i32_0, %c0_i32_1 : i32, i32, i32, i32
  }
  func.func @transform_2(%arg0: i32) -> (i32, i32) {
    %c0_i32 = arith.constant 0 : i32
    %c0_i32_0 = arith.constant 0 : i32
    %c0_i32_1 = arith.constant 0 : i32
    return %c0_i32, %c0_i32_0 : i32, i32
  }
  func.func @transform_3(%arg0: i32) -> (i32, i32) {
    %c0_i32 = arith.constant 0 : i32
    %c0_i32_0 = arith.constant 0 : i32
    %c0_i32_1 = arith.constant 0 : i32
    return %c0_i32, %c0_i32_0 : i32, i32
  }
  func.func @transform_4(%arg0: i32) -> (i32, i32) {
    %c0_i32 = arith.constant 0 : i32
    %c0_i32_0 = arith.constant 0 : i32
    %c0_i32_1 = arith.constant 0 : i32
    return %c0_i32, %c0_i32_0 : i32, i32
  }
  func.func @transform_5(%arg0: i32) -> (i32, i32) {
    %c0_i32 = arith.constant 0 : i32
    %c0_i32_0 = arith.constant 0 : i32
    %c0_i32_1 = arith.constant 0 : i32
    return %c0_i32, %c0_i32_0 : i32, i32
  }
  func.func @transform_6(%arg0: i32) -> (i32, i32) {
    %c0_i32 = arith.constant 0 : i32
    %c0_i32_0 = arith.constant 0 : i32
    %c0_i32_1 = arith.constant 0 : i32
    return %c0_i32, %c0_i32_0 : i32, i32
  }
  func.func @transform_7(%arg0: i32) -> (i32, i32) {
    %c0_i32 = arith.constant 0 : i32
    %c0_i32_0 = arith.constant 0 : i32
    %c0_i32_1 = arith.constant 0 : i32
    return %c0_i32, %c0_i32_0 : i32, i32
  }
  func.func @transform_8(%arg0: i32) -> (i32, i32, i32) {
    %c0_i32 = arith.constant 0 : i32
    %c0_i32_0 = arith.constant 0 : i32
    %c0_i32_1 = arith.constant 0 : i32
    return %arg0, %c0_i32, %c0_i32_0 : i32, i32, i32
  }
}

</mosaic_0001>

<llo_original>
// kernel: custom_model_no_align.1
$region0: #{custom_model_no_align.1}
  #allocation0 [shape = 'u32[]', space=smem, size = 0x4, offset = 0x4, fixed_abs, tag = 'smem constant byte address 0x4 - core index']
  #allocation1 [shape = 'u32[144,128]{1,0:T(1,128)}', space=vmem, size = 0x12000, scoped, tag = 'internal scratch']
  #allocation2 [shape = 'f32[16,384]{1,0:T(8,128)}', space=vmem, size = 0x6000, scoped, tag = 'scratch operand']
  %s0 = inlined_call_operand.hbm [shape: f32[2,2,128], index: 0, kind: input, shape index: {}]
  %s1 = inlined_call_operand.vmem [shape: f32[2,3,2,128], index: 1, kind: input, shape index: {}]
  %s2 = inlined_call_operand.vmem [shape: f32[16,128], index: 2, kind: input, shape index: {}]
  %s3 = inlined_call_operand.vmem [shape: f32[16,1], index: 3, kind: input, shape index: {}]
  %s4 = inlined_call_operand.vmem [shape: f32[16,128], index: 4, kind: input, shape index: {}]
  %s5 = inlined_call_operand.vmem [shape: f32[16,1], index: 5, kind: input, shape index: {}]
  %s6 = inlined_call_operand.vmem [shape: f32[8,16], index: 6, kind: input, shape index: {}]
  %s7 = inlined_call_operand.vmem [shape: f32[8,1], index: 7, kind: input, shape index: {}]
  %s8 = inlined_call_operand.vmem [shape: f32[2,8,1], index: 8, kind: output, shape index: {}]
  %s9 = sld [smem:[#allocation0]]
  $region69: #{custom_model_no_align.1} parent=0
    _
  %s11 = ssub.s32 1, %s9
  %s12 = scalar_select 0, %s11, %s9
  $region1: #{custom_model_no_align.1} parent=0
    #allocation3 [shape = 'u8[2048]{0}', space=vmem, size = 0x800, scoped, tag = 'input window, operand 0']
    #allocation4 [shape = 's32[2]{0}', space=sflag, size = 0x8, scoped, tag = 'scoped memory for custom_model_no_align.1']
    %13 = vsyncpa [#allocation4], 0
    %s14 = scalar_lea.sflag [#allocation4], 1
    %15 = vsyncpa %s14, 0
    loop: start=0, step=1, limit=4
    $region2: #{custom_model_no_align.1} parent=1 // loop_pre_header
      _
    $region3: #{custom_model_no_align.1} parent=1 // loop_header
      %s17 = sphi 0, %s21
      %p18 = scmp.ge.s32.totalorder %s17, 4
      %s27 = sphi 0, %s29
      %s30 = sphi 0, %s27
      %s31 = sphi 0, %s30
      %s47 = sphi 0, %s31
      %s53 = sphi 0, %s55
      %s56 = sphi 0, %s53
      %s57 = sphi 0, %s56
      %s73 = sphi 0, %s57
      %s77 = sphi 0, %s77
      %s79 = sphi 0, %s77
      %s80 = sphi 0, %s79
      %s94 = sphi 0, %s80
      %s98 = sphi 0, %s98
      %s100 = sphi 0, %s98
      %s101 = sphi 0, %s100
      %s115 = sphi 0, %s101
      %s119 = sphi 0, %s119
      %s121 = sphi 0, %s119
      %s122 = sphi 0, %s121
      %s136 = sphi 0, %s122
      %s140 = sphi 0, %s140
      %s142 = sphi 0, %s140
      %s143 = sphi 0, %s142
      %s157 = sphi 0, %s143
      %s161 = sphi 0, %s161
      %s163 = sphi 0, %s161
      %s164 = sphi 0, %s163
      %s178 = sphi 0, %s164
      %s182 = sphi 0, %s182
      %s184 = sphi 0, %s182
      %s185 = sphi 0, %s184
      %s199 = sphi 0, %s185
      %s205 = sphi 0, %s207
      %s208 = sphi 0, %s205
      %s209 = sphi 0, %s208
      %s225 = sphi 0, %s209
    $region4: #{custom_model_no_align.1} parent=1 // loop_header_branch
      %20 = sbr.rel (%p18) target = $region8
    $region5: #{custom_model_no_align.1} parent=1 // loop_body
      %s22 = ssub.s32 %s17, 1
      %s23 = ssub.s32 %s17, 2
      %s24 = sadd.s32 %s17, 1
      %s25 = ssub.s32 %s17, %s24
      %p26 = scmp.eq.s32.totalorder %s25, 0
      %s28 = sadd.s32 %s27, 1
      %s29 = scalar_select %p26, %s27, %s28
      %p32 = pneg %p26
      %p33 = scmp.eq.s32.totalorder %s17, 1
      %p34 = por %p32, %p33
      %p35 = scmp.ne.s32.totalorder %s27, %s30
      %p36 = scmp.eq.s32.totalorder %s17, 0
      %p37 = por %p35, %p36
      %p38 = scmp.ne.s32.totalorder %s27, %s30
      %p39 = scmp.eq.s32.totalorder %s22, 1
      %p40 = por %p38, %p39
      %p41 = scmp.ne.s32.totalorder %s30, %s31
      %p42 = scmp.eq.s32.totalorder %s22, 0
      %p43 = por %p41, %p42
      %p44 = scmp.ne.s32.totalorder %s30, %s31
      %p45 = scmp.eq.s32.totalorder %s23, 1
      %p46 = por %p44, %p45
      %p48 = scmp.ne.s32.totalorder %s31, %s47
      %p49 = scmp.eq.s32.totalorder %s23, 0
      %p50 = por %p48, %p49
      %s51 = ssub.s32 %s17, %s24
      %p52 = scmp.eq.s32.totalorder %s51, 0
      %s54 = sadd.s32 %s53, 1
      %s55 = scalar_select %p52, %s53, %s54
      %p58 = pneg %p52
      %p59 = scmp.eq.s32.totalorder %s17, 1
      %p60 = por %p58, %p59
      %p61 = scmp.ne.s32.totalorder %s53, %s56
      %p62 = scmp.eq.s32.totalorder %s17, 0
      %p63 = por %p61, %p62
      %p64 = scmp.ne.s32.totalorder %s53, %s56
      %p65 = scmp.eq.s32.totalorder %s22, 1
      %p66 = por %p64, %p65
      %p67 = scmp.ne.s32.totalorder %s56, %s57
      %p68 = scmp.eq.s32.totalorder %s22, 0
      %p69 = por %p67, %p68
      %p70 = scmp.ne.s32.totalorder %s56, %s57
      %p71 = scmp.eq.s32.totalorder %s23, 1
      %p72 = por %p70, %p71
      %p74 = scmp.ne.s32.totalorder %s57, %s73
      %p75 = scmp.eq.s32.totalorder %s23, 0
      %p76 = por %p74, %p75
      %s78 = sadd.s32 %s77, 1
      %p81 = scmp.eq.s32.totalorder %s17, 1
      %p82 = scmp.ne.s32.totalorder %s77, %s79
      %p83 = scmp.eq.s32.totalorder %s17, 0
      %p84 = por %p82, %p83
      %p85 = scmp.ne.s32.totalorder %s77, %s79
      %p86 = scmp.eq.s32.totalorder %s22, 1
      %p87 = por %p85, %p86
      %p88 = scmp.ne.s32.totalorder %s79, %s80
      %p89 = scmp.eq.s32.totalorder %s22, 0
      %p90 = por %p88, %p89
      %p91 = scmp.ne.s32.totalorder %s79, %s80
      %p92 = scmp.eq.s32.totalorder %s23, 1
      %p93 = por %p91, %p92
      %p95 = scmp.ne.s32.totalorder %s80, %s94
      %p96 = scmp.eq.s32.totalorder %s23, 0
      %p97 = por %p95, %p96
      %s99 = sadd.s32 %s98, 1
      %p102 = scmp.eq.s32.totalorder %s17, 1
      %p103 = scmp.ne.s32.totalorder %s98, %s100
      %p104 = scmp.eq.s32.totalorder %s17, 0
      %p105 = por %p103, %p104
      %p106 = scmp.ne.s32.totalorder %s98, %s100
      %p107 = scmp.eq.s32.totalorder %s22, 1
      %p108 = por %p106, %p107
      %p109 = scmp.ne.s32.totalorder %s100, %s101
      %p110 = scmp.eq.s32.totalorder %s22, 0
      %p111 = por %p109, %p110
      %p112 = scmp.ne.s32.totalorder %s100, %s101
      %p113 = scmp.eq.s32.totalorder %s23, 1
      %p114 = por %p112, %p113
      %p116 = scmp.ne.s32.totalorder %s101, %s115
      %p117 = scmp.eq.s32.totalorder %s23, 0
      %p118 = por %p116, %p117
      %s120 = sadd.s32 %s119, 1
      %p123 = scmp.eq.s32.totalorder %s17, 1
      %p124 = scmp.ne.s32.totalorder %s119, %s121
      %p125 = scmp.eq.s32.totalorder %s17, 0
      %p126 = por %p124, %p125
      %p127 = scmp.ne.s32.totalorder %s119, %s121
      %p128 = scmp.eq.s32.totalorder %s22, 1
      %p129 = por %p127, %p128
      %p130 = scmp.ne.s32.totalorder %s121, %s122
      %p131 = scmp.eq.s32.totalorder %s22, 0
      %p132 = por %p130, %p131
      %p133 = scmp.ne.s32.totalorder %s121, %s122
      %p134 = scmp.eq.s32.totalorder %s23, 1
      %p135 = por %p133, %p134
      %p137 = scmp.ne.s32.totalorder %s122, %s136
      %p138 = scmp.eq.s32.totalorder %s23, 0
      %p139 = por %p137, %p138
      %s141 = sadd.s32 %s140, 1
      %p144 = scmp.eq.s32.totalorder %s17, 1
      %p145 = scmp.ne.s32.totalorder %s140, %s142
      %p146 = scmp.eq.s32.totalorder %s17, 0
      %p147 = por %p145, %p146
      %p148 = scmp.ne.s32.totalorder %s140, %s142
      %p149 = scmp.eq.s32.totalorder %s22, 1
      %p150 = por %p148, %p149
      %p151 = scmp.ne.s32.totalorder %s142, %s143
      %p152 = scmp.eq.s32.totalorder %s22, 0
      %p153 = por %p151, %p152
      %p154 = scmp.ne.s32.totalorder %s142, %s143
      %p155 = scmp.eq.s32.totalorder %s23, 1
      %p156 = por %p154, %p155
      %p158 = scmp.ne.s32.totalorder %s143, %s157
      %p159 = scmp.eq.s32.totalorder %s23, 0
      %p160 = por %p158, %p159
      %s162 = sadd.s32 %s161, 1
      %p165 = scmp.eq.s32.totalorder %s17, 1
      %p166 = scmp.ne.s32.totalorder %s161, %s163
      %p167 = scmp.eq.s32.totalorder %s17, 0
      %p168 = por %p166, %p167
      %p169 = scmp.ne.s32.totalorder %s161, %s163
      %p170 = scmp.eq.s32.totalorder %s22, 1
      %p171 = por %p169, %p170
      %p172 = scmp.ne.s32.totalorder %s163, %s164
      %p173 = scmp.eq.s32.totalorder %s22, 0
      %p174 = por %p172, %p173
      %p175 = scmp.ne.s32.totalorder %s163, %s164
      %p176 = scmp.eq.s32.totalorder %s23, 1
      %p177 = por %p175, %p176
      %p179 = scmp.ne.s32.totalorder %s164, %s178
      %p180 = scmp.eq.s32.totalorder %s23, 0
      %p181 = por %p179, %p180
      %s183 = sadd.s32 %s182, 1
      %p186 = scmp.eq.s32.totalorder %s17, 1
      %p187 = scmp.ne.s32.totalorder %s182, %s184
      %p188 = scmp.eq.s32.totalorder %s17, 0
      %p189 = por %p187, %p188
      %p190 = scmp.ne.s32.totalorder %s182, %s184
      %p191 = scmp.eq.s32.totalorder %s22, 1
      %p192 = por %p190, %p191
      %p193 = scmp.ne.s32.totalorder %s184, %s185
      %p194 = scmp.eq.s32.totalorder %s22, 0
      %p195 = por %p193, %p194
      %p196 = scmp.ne.s32.totalorder %s184, %s185
      %p197 = scmp.eq.s32.totalorder %s23, 1
      %p198 = por %p196, %p197
      %p200 = scmp.ne.s32.totalorder %s185, %s199
      %p201 = scmp.eq.s32.totalorder %s23, 0
      %p202 = por %p200, %p201
      %s203 = ssub.s32 %s17, %s24
      %p204 = scmp.eq.s32.totalorder %s203, 0
      %s206 = sadd.s32 %s205, 1
      %s207 = scalar_select %p204, %s205, %s206
      %p210 = pneg %p204
      %p211 = scmp.eq.s32.totalorder %s17, 1
      %p212 = por %p210, %p211
      %p213 = scmp.ne.s32.totalorder %s205, %s208
      %p214 = scmp.eq.s32.totalorder %s17, 0
      %p215 = por %p213, %p214
      %p216 = scmp.ne.s32.totalorder %s205, %s208
      %p217 = scmp.eq.s32.totalorder %s22, 1
      %p218 = por %p216, %p217
      %p219 = scmp.ne.s32.totalorder %s208, %s209
      %p220 = scmp.eq.s32.totalorder %s22, 0
      %p221 = por %p219, %p220
      %p222 = scmp.ne.s32.totalorder %s208, %s209
      %p223 = scmp.eq.s32.totalorder %s23, 1
      %p224 = por %p222, %p223
      %p226 = scmp.ne.s32.totalorder %s209, %s225
      %p227 = scmp.eq.s32.totalorder %s23, 0
      %p228 = por %p226, %p227
      %p229 = scmp.le.s32.totalorder 1, %s17
      %p230 = scmp.lt.s32.totalorder %s17, 3
      %p231 = pnand %p229, %p230
      %p232 = pneg %p231
      // Predicated region
      $region9: #{custom_model_no_align.1} parent=5 // pred_check
        _
      $region10: #{custom_model_no_align.1} parent=5 // pred_check_branch
        %234 = sbr.rel (%p231) target = $region12
      $region11: #{custom_model_no_align.1} parent=5 // pred_region
        %s235 = ssub.s32 %s17, 1
        // Predicated region
        $region13: #{custom_model_no_align.1} parent=11 // pred_check
          %p236 = pneg %p90
        $region14: #{custom_model_no_align.1} parent=11 // pred_check_branch
          %238 = sbr.rel (%p236) target = $region16
        $region15: #{custom_model_no_align.1} parent=11 // pred_region
          _
        $region16: #{custom_model_no_align.1} parent=11 // pred_fallthru
          _
        // Predicated region
        $region17: #{custom_model_no_align.1} parent=11 // pred_check
          %p239 = pneg %p111
        $region18: #{custom_model_no_align.1} parent=11 // pred_check_branch
          %241 = sbr.rel (%p239) target = $region20
        $region19: #{custom_model_no_align.1} parent=11 // pred_region
          _
        $region20: #{custom_model_no_align.1} parent=11 // pred_fallthru
          _
        // Predicated region
        $region21: #{custom_model_no_align.1} parent=11 // pred_check
          %p242 = pneg %p132
        $region22: #{custom_model_no_align.1} parent=11 // pred_check_branch
          %244 = sbr.rel (%p242) target = $region24
        $region23: #{custom_model_no_align.1} parent=11 // pred_region
          _
        $region24: #{custom_model_no_align.1} parent=11 // pred_fallthru
          _
        // Predicated region
        $region25: #{custom_model_no_align.1} parent=11 // pred_check
          %p245 = pneg %p153
        $region26: #{custom_model_no_align.1} parent=11 // pred_check_branch
          %247 = sbr.rel (%p245) target = $region28
        $region27: #{custom_model_no_align.1} parent=11 // pred_region
          _
        $region28: #{custom_model_no_align.1} parent=11 // pred_fallthru
          _
        // Predicated region
        $region29: #{custom_model_no_align.1} parent=11 // pred_check
          %p248 = pneg %p174
        $region30: #{custom_model_no_align.1} parent=11 // pred_check_branch
          %250 = sbr.rel (%p248) target = $region32
        $region31: #{custom_model_no_align.1} parent=11 // pred_region
          _
        $region32: #{custom_model_no_align.1} parent=11 // pred_fallthru
          _
        // Predicated region
        $region33: #{custom_model_no_align.1} parent=11 // pred_check
          %p251 = pneg %p195
        $region34: #{custom_model_no_align.1} parent=11 // pred_check_branch
          %253 = sbr.rel (%p251) target = $region36
        $region35: #{custom_model_no_align.1} parent=11 // pred_region
          _
        $region36: #{custom_model_no_align.1} parent=11 // pred_fallthru
          _
      $region12: #{custom_model_no_align.1} parent=5 // pred_fallthru
        _
      %p254 = scmp.lt.s32.totalorder %s17, 2
      // Predicated region
      $region37: #{custom_model_no_align.1} parent=5 // pred_check
        %p255 = pneg %p254
      $region38: #{custom_model_no_align.1} parent=5 // pred_check_branch
        %257 = sbr.rel (%p255) target = $region40
      $region39: #{custom_model_no_align.1} parent=5 // pred_region
        // Predicated region
        $region41: #{custom_model_no_align.1} parent=39 // pred_check
          %p258 = pneg %p37
        $region42: #{custom_model_no_align.1} parent=39 // pred_check_branch
          %260 = sbr.rel (%p258) target = $region44
        $region43: #{custom_model_no_align.1} parent=39 // pred_region
          %s261 = sand.u32 %s27, 1
          %s262 = scalar_lea.sflag [#allocation4], %s261
          %s263 = sand.u32 %s27, 1
          %s264 = smul.addr %s263, 2
          %s265 = scalar_lea.vmem [#allocation3], %s264
          %s267 = ssub.s32 32, 32
          %268 = vsyncadd %s262, %s267
          %s269 = smul.addr %s17, 32
          %s270 = scalar_lea.hbm %s0, %s269
          %s272 = sshll.u32 %s265, 4
          %s273 = int_to_ptr.vmem [resolvable:$true] %s272
          %275 = dma.hbm_to_vmem [thread:$0]  %s270, 32, %s273, %s262
        $region44: #{custom_model_no_align.1} parent=39 // pred_fallthru
          _
        // Predicated region
        $region45: #{custom_model_no_align.1} parent=39 // pred_check
          %p276 = pneg %p63
        $region46: #{custom_model_no_align.1} parent=39 // pred_check_branch
          %278 = sbr.rel (%p276) target = $region48
        $region47: #{custom_model_no_align.1} parent=39 // pred_region
          %p279 = scmp.lt.s32.totalorder %s17, 1
          %s280 = scalar_select %p279, %s17, 1
          %s281 = smul.addr %s280, 3
          %s282 = smul.addr %s281, 2
          %s283 = scalar_lea.vmem %s1, %s282
        $region48: #{custom_model_no_align.1} parent=39 // pred_fallthru
          _
      $region40: #{custom_model_no_align.1} parent=5 // pred_fallthru
        _
      %p284 = scmp.le.s32.totalorder 1, %s17
      %p285 = scmp.lt.s32.totalorder %s17, 3
      %p286 = pnand %p284, %p285
      %p287 = pneg %p286
      // Predicated region
      $region49: #{custom_model_no_align.1} parent=5 // pred_check
        _
      $region50: #{custom_model_no_align.1} parent=5 // pred_check_branch
        %289 = sbr.rel (%p286) target = $region52
      $region51: #{custom_model_no_align.1} parent=5 // pred_region
        %s290 = ssub.s32 %s17, 1
        %s291 = sand.u32 %s30, 1
        %s292 = scalar_lea.sflag [#allocation4], %s291
        %s293 = sand.u32 %s30, 1
        %s294 = smul.addr %s293, 2
        %s295 = scalar_lea.vmem [#allocation3], %s294
        // Predicated region
        $region53: #{custom_model_no_align.1} parent=51 // pred_check
          %p296 = pneg %p43
        $region54: #{custom_model_no_align.1} parent=51 // pred_check_branch
          %298 = sbr.rel (%p296) target = $region56
        $region55: #{custom_model_no_align.1} parent=51 // pred_region
          %299 = dma.done %s292, 32
        $region56: #{custom_model_no_align.1} parent=51 // pred_fallthru
          _
        %s300 = sand.u32 %s30, 1
        %s301 = scalar_lea.sflag [#allocation4], %s300
        %s302 = sand.u32 %s30, 1
        %s303 = smul.addr %s302, 2
        %s304 = scalar_lea.vmem [#allocation3], %s303
        %p305 = pneg %p43
        %p306 = pneg %p40
        %p307 = scmp.lt.s32.totalorder %s22, 1
        %s308 = scalar_select %p307, %s22, 1
        %s309 = smul.addr %s308, 3
        %s310 = smul.addr %s309, 2
        %s311 = scalar_lea.vmem %s1, %s310
        %p312 = pneg %p69
        %p313 = pneg %p66
        %p314 = pneg %p90
        %p315 = pneg %p87
        %p316 = pneg %p111
        %p317 = pneg %p108
        %p318 = pneg %p132
        %p319 = pneg %p129
        %p320 = pneg %p153
        %p321 = pneg %p150
        %p322 = pneg %p174
        %p323 = pneg %p171
        %p324 = pneg %p195
        %p325 = pneg %p192
        %p326 = pneg %p221
        %p327 = pneg %p218
        %p328 = scmp.lt.s32.totalorder %s22, 1
        %s329 = scalar_select %p328, %s22, 1
        %s330 = smul.addr %s329, 8
        %s331 = scalar_lea.vmem %s8, %s330
        %p332 = scmp.lt.s32.totalorder %s22, 1
        %s333 = scalar_select %p332, %s22, 1
        %s334 = smul.addr %s333, 3
        %s335 = smul.addr %s334, 2
        %s336 = scalar_lea.vmem %s1, %s335
        %p337 = scmp.lt.s32.totalorder %s22, 1
        %s338 = scalar_select %p337, %s22, 1
        %s339 = smul.addr %s338, 8
        %s340 = scalar_lea.vmem %s8, %s339
        %341 = vst [vmem:[#allocation2] sm:$0xff] 0.0
        %342 = vst [vmem:[#allocation2 + $0x8] sm:$0xff] 0.0
        %343 = vst [vmem:[#allocation2 + $0x10] sm:$0xff] 0.0
        %344 = vst [vmem:[#allocation2 + $0x18] sm:$0xff] 0.0
        %345 = vst [vmem:[#allocation2 + $0x20] sm:$0xff] 0.0
        %346 = vst [vmem:[#allocation2 + $0x28] sm:$0xff] 0.0
        %v347 = vld [vmem:[%s295] sm:$0x3]
        %348 = vst [vmem:[#allocation2 + $0x8] sm:$0x3] %v347
        %v349 = vld [vmem:[%s336] sm:$0x3]
        %v350 = vld [vmem:[%s336 + $0x2] sm:$0x3]
        %v351 = vld [vmem:[%s336 + $0x4] sm:$0x3]
        %vm352 = vcmask 1041408
        %v353 = vsel %vm352, %v349, 0.0
        %v354 = vsel %vm352, %v350, 0.0
        %v355 = vadd.f32 %v353, %v354
        %v356 = vsel %vm352, %v351, 0.0
        %v357 = vadd.f32 %v355, %v356
        %v358 = vrcp.pop 3.0
        %v359 = vmul.f32 %v357, %v358
        %360 = vst [vmem:[#allocation2 + $0x20] sm:$0x3] %v359
        %v361 = vld [vmem:[#allocation2] sm:$0xff]
        %v362 = vld [vmem:[#allocation2 + $0x8] sm:$0xff]
        %v363 = vld [vmem:[#allocation2 + $0x10] sm:$0xff]
        %v364 = vld [vmem:[#allocation2 + $0x18] sm:$0xff]
        %v365 = vld [vmem:[#allocation2 + $0x20] sm:$0xff]
        %v366 = vld [vmem:[#allocation2 + $0x28] sm:$0xff]
        %371 = vrot.lane.b32.xlu0 %v361, 127
        %v372 = vpop.permute.xlu0 %371
        %373 = vrot.lane.b32.xlu0 %v362, 127
        %v374 = vpop.permute.xlu0 %373
        %375 = vrot.lane.b32.xlu0 %v364, 127
        %v376 = vpop.permute.xlu0 %375
        %377 = vrot.lane.b32.xlu0 %v365, 127
        %v378 = vpop.permute.xlu0 %377
        %vm379 = vcmask 1039360
        %v380 = vsel %vm379, %v372, %v374
        %v381 = vsel %vm379, %v376, %v378
        %382 = vrot.lane.b32.xlu0 %v361, 126
        %v383 = vpop.permute.xlu0 %382
        %384 = vrot.lane.b32.xlu0 %v362, 126
        %v385 = vpop.permute.xlu0 %384
        %386 = vrot.lane.b32.xlu0 %v364, 126
        %v387 = vpop.permute.xlu0 %386
        %388 = vrot.lane.b32.xlu0 %v365, 126
        %v389 = vpop.permute.xlu0 %388
        %vm390 = vcmask 1031168
        %v391 = vsel %vm390, %v383, %v385
        %v392 = vsel %vm390, %v387, %v389
        %393 = vrot.lane.b32.xlu0 %v362, 125
        %v394 = vpop.permute.xlu0 %393
        %395 = vrot.lane.b32.xlu0 %v365, 125
        %v396 = vpop.permute.xlu0 %395
        %399 = vrot.lane.b32.xlu0 %v362, 124
        %v400 = vpop.permute.xlu0 %399
        %401 = vrot.lane.b32.xlu0 %v363, 124
        %v402 = vpop.permute.xlu0 %401
        %403 = vrot.lane.b32.xlu0 %v365, 124
        %v404 = vpop.permute.xlu0 %403
        %405 = vrot.lane.b32.xlu0 %v366, 124
        %v406 = vpop.permute.xlu0 %405
        %vm407 = vcmask 1014784
        %v408 = vsel %vm407, %v400, %v402
        %v409 = vsel %vm407, %v404, %v406
        %410 = vrot.lane.b32.xlu0 %v362, 123
        %v411 = vpop.permute.xlu0 %410
        %412 = vrot.lane.b32.xlu0 %v363, 123
        %v413 = vpop.permute.xlu0 %412
        %414 = vrot.lane.b32.xlu0 %v365, 123
        %v415 = vpop.permute.xlu0 %414
        %416 = vrot.lane.b32.xlu0 %v366, 123
        %v417 = vpop.permute.xlu0 %416
        %vm418 = vcmask 1006592
        %v419 = vsel %vm418, %v411, %v413
        %v420 = vsel %vm418, %v415, %v417
        %421 = vrot.lane.b32.xlu0 %v362, 122
        %v422 = vpop.permute.xlu0 %421
        %423 = vrot.lane.b32.xlu0 %v363, 122
        %v424 = vpop.permute.xlu0 %423
        %425 = vrot.lane.b32.xlu0 %v365, 122
        %v426 = vpop.permute.xlu0 %425
        %427 = vrot.lane.b32.xlu0 %v366, 122
        %v428 = vpop.permute.xlu0 %427
        %vm429 = vcmask 998400
        %v430 = vsel %vm429, %v422, %v424
        %v431 = vsel %vm429, %v426, %v428
        %432 = vrot.lane.b32.xlu0 %v362, 121
        %v433 = vpop.permute.xlu0 %432
        %434 = vrot.lane.b32.xlu0 %v363, 121
        %v435 = vpop.permute.xlu0 %434
        %436 = vrot.lane.b32.xlu0 %v365, 121
        %v437 = vpop.permute.xlu0 %436
        %438 = vrot.lane.b32.xlu0 %v366, 121
        %v439 = vpop.permute.xlu0 %438
        %vm440 = vcmask 990208
        %v441 = vsel %vm440, %v433, %v435
        %v442 = vsel %vm440, %v437, %v439
        %v443 = vld [vmem:[%s2] sm:$0xff]
        %v444 = vld [vmem:[%s2 + $0x8] sm:$0xff]
        %v445 = vld [vmem:[%s3] sm:$0xff]
        %v446 = vld [vmem:[%s3 + $0x8] sm:$0xff]
        %448 = vset.pattern.permute.xlu0 0
        %449 = vperm.xlu0 %448, %v445
        %v450 = vpop.permute.xlu0 %449
        %453 = vset.pattern.permute.xlu0 0
        %454 = vperm.xlu0 %453, %v446
        %v455 = vpop.permute.xlu0 %454
        %457 = vrot.lane.b32.xlu0 %v361, 3
        %v458 = vpop.permute.xlu0 %457
        %459 = vrot.lane.b32.xlu0 %v362, 3
        %v460 = vpop.permute.xlu0 %459
        %461 = vrot.lane.b32.xlu0 %v364, 3
        %v462 = vpop.permute.xlu0 %461
        %463 = vrot.lane.b32.xlu0 %v365, 3
        %v464 = vpop.permute.xlu0 %463
        %465 = vrot.lane.b32.xlu0 %v380, 3
        %v466 = vpop.permute.xlu0 %465
        %467 = vrot.lane.b32.xlu0 %v374, 3
        %v468 = vpop.permute.xlu0 %467
        %469 = vrot.lane.b32.xlu0 %v381, 3
        %v470 = vpop.permute.xlu0 %469
        %471 = vrot.lane.b32.xlu0 %v378, 3
        %v472 = vpop.permute.xlu0 %471
        %473 = vrot.lane.b32.xlu0 %v391, 3
        %v474 = vpop.permute.xlu0 %473
        %475 = vrot.lane.b32.xlu0 %v385, 3
        %v476 = vpop.permute.xlu0 %475
        %477 = vrot.lane.b32.xlu0 %v392, 3
        %v478 = vpop.permute.xlu0 %477
        %479 = vrot.lane.b32.xlu0 %v389, 3
        %v480 = vpop.permute.xlu0 %479
        %481 = vrot.lane.b32.xlu0 %v394, 3
        %v482 = vpop.permute.xlu0 %481
        %483 = vrot.lane.b32.xlu0 %v396, 3
        %v484 = vpop.permute.xlu0 %483
        %485 = vrot.lane.b32.xlu0 %v400, 3
        %v486 = vpop.permute.xlu0 %485
        %487 = vrot.lane.b32.xlu0 %v408, 3
        %v488 = vpop.permute.xlu0 %487
        %489 = vrot.lane.b32.xlu0 %v404, 3
        %v490 = vpop.permute.xlu0 %489
        %491 = vrot.lane.b32.xlu0 %v409, 3
        %v492 = vpop.permute.xlu0 %491
        %493 = vrot.lane.b32.xlu0 %v411, 3
        %v494 = vpop.permute.xlu0 %493
        %495 = vrot.lane.b32.xlu0 %v419, 3
        %v496 = vpop.permute.xlu0 %495
        %497 = vrot.lane.b32.xlu0 %v415, 3
        %v498 = vpop.permute.xlu0 %497
        %499 = vrot.lane.b32.xlu0 %v420, 3
        %v500 = vpop.permute.xlu0 %499
        %501 = vrot.lane.b32.xlu0 %v422, 3
        %v502 = vpop.permute.xlu0 %501
        %503 = vrot.lane.b32.xlu0 %v430, 3
        %v504 = vpop.permute.xlu0 %503
        %505 = vrot.lane.b32.xlu0 %v426, 3
        %v506 = vpop.permute.xlu0 %505
        %507 = vrot.lane.b32.xlu0 %v431, 3
        %v508 = vpop.permute.xlu0 %507
        %509 = vrot.lane.b32.xlu0 %v433, 3
        %v510 = vpop.permute.xlu0 %509
        %511 = vrot.lane.b32.xlu0 %v441, 3
        %v512 = vpop.permute.xlu0 %511
        %513 = vrot.lane.b32.xlu0 %v437, 3
        %v514 = vpop.permute.xlu0 %513
        %515 = vrot.lane.b32.xlu0 %v442, 3
        %v516 = vpop.permute.xlu0 %515
        %vm517 = vcmask 23552
        %v518 = vsel %vm517, %v458, %v460
        %v519 = vsel %vm517, %v462, %v464
        %v520 = vsel %vm517, %v466, %v468
        %v521 = vsel %vm517, %v470, %v472
        %v522 = vsel %vm517, %v474, %v476
        %v523 = vsel %vm517, %v478, %v480
        %v524 = vsel %vm517, %v486, %v488
        %v525 = vsel %vm517, %v490, %v492
        %v526 = vsel %vm517, %v494, %v496
        %v527 = vsel %vm517, %v498, %v500
        %v528 = vsel %vm517, %v502, %v504
        %v529 = vsel %vm517, %v506, %v508
        %v530 = vsel %vm517, %v510, %v512
        %v531 = vsel %vm517, %v514, %v516
        %548 = vmatprep.subr.mxu0 0.0
        %549 = vmatpush1.msra.mxu0 %v531
        %550 = vmatprep.subr.mxu0 0.0
        %551 = vmatpush1.msra.mxu0 %v530
        %552 = vmatprep.subr.mxu0 0.0
        %553 = vmatpush1.msra.mxu0 %v529
        %554 = vmatprep.subr.mxu0 0.0
        %555 = vmatpush1.msra.mxu0 %v528
        %556 = vmatprep.subr.mxu0 0.0
        %557 = vmatpush1.msra.mxu0 %v527
        %558 = vmatprep.subr.mxu0 0.0
        %559 = vmatpush1.msra.mxu0 %v526
        %560 = vmatprep.subr.mxu0 0.0
        %561 = vmatpush1.msra.mxu0 %v525
        %562 = vmatprep.subr.mxu0 0.0
        %563 = vmatpush1.msra.mxu0 %v524
        %564 = vmatprep.subr.mxu0 0.0
        %565 = vmatpush1.msra.mxu0 %v484
        %566 = vmatprep.subr.mxu0 0.0
        %567 = vmatpush1.msra.mxu0 %v482
        %568 = vmatprep.subr.mxu0 0.0
        %569 = vmatpush1.msra.mxu0 %v523
        %570 = vmatprep.subr.mxu0 0.0
        %571 = vmatpush1.msra.mxu0 %v522
        %572 = vmatprep.subr.mxu0 0.0
        %573 = vmatpush1.msra.mxu0 %v521
        %574 = vmatprep.subr.mxu0 0.0
        %575 = vmatpush1.msra.mxu0 %v520
        %576 = vmatprep.subr.mxu0 0.0
        %577 = vmatpush1.msra.mxu0 %v519
        %578 = vmatprep.subr.mxu0 0.0
        %579 = vmatpush1.msra.mxu0 %v518
        %580 = vmatprep.subr.mxu0 0.0
        %581 = vmatpush2.msra.mxu0 0.0
        %582 = vmatprep.subr.mxu0 0.0
        %583 = vmatpush2.msra.mxu0 0.0
        %584 = vmatprep.subr.mxu0 0.0
        %585 = vmatpush2.msra.mxu0 0.0
        %586 = vmatprep.subr.mxu0 0.0
        %587 = vmatpush2.msra.mxu0 0.0
        %588 = vmatprep.subr.mxu0 0.0
        %589 = vmatpush2.msra.mxu0 0.0
        %590 = vmatprep.subr.mxu0 0.0
        %591 = vmatpush2.msra.mxu0 0.0
        %592 = vmatprep.subr.mxu0 0.0
        %593 = vmatpush2.msra.mxu0 0.0
        %594 = vmatprep.subr.mxu0 0.0
        %595 = vmatpush2.msra.mxu0 0.0
        %596 = vmatprep.subr.mxu0 0.0
        %597 = vmatpush2.msra.mxu0 0.0
        %598 = vmatprep.subr.mxu0 0.0
        %599 = vmatpush2.msra.mxu0 0.0
        %600 = vmatprep.subr.mxu0 0.0
        %601 = vmatpush2.msra.mxu0 0.0
        %602 = vmatprep.subr.mxu0 0.0
        %603 = vmatpush2.msra.mxu0 0.0
        %604 = vmatprep.subr.mxu0 0.0
        %605 = vmatpush2.msra.mxu0 0.0
        %606 = vmatprep.subr.mxu0 0.0
        %607 = vmatpush2.msra.mxu0 0.0
        %608 = vmatprep.subr.mxu0 0.0
        %609 = vmatpush2.msra.mxu0 0.0
        %610 = vmatprep.subr.mxu0 0.0
        %611 = vmatpush2.msra.mxu0 0.0
        %612 = vmatprep.mubr.f32.mxu0 0.0
        %613 = vmatmul.mubr.f32.gmra.mxu0 %v443
        %v614 = vpop.f32.mrf.mxu0
        %v615 = vadd.f32 %v450, %v614
        %v616 = vpop.f32.mrf.mxu0
        %617 = vmatprep.mubr.f32.mxu0 0.0
        %618 = vmatmul.mubr.f32.gmra.mxu0 %v444
        %v619 = vpop.f32.mrf.mxu0
        %v620 = vadd.f32 %v455, %v619
        %v621 = vpop.f32.mrf.mxu0
        %622 = vdwg.mxu0
        %v623 = vmax.f32 %v615, 0.0
        %v624 = vmax.f32 %v620, 0.0
        %625 = vst [vmem:[#allocation2 + $0x8] sm:$0xff] %v623
        %626 = vst [vmem:[#allocation2 + $0x20] sm:$0xff] %v624
        %v627 = vld [vmem:[#allocation2] sm:$0xff]
        %v628 = vld [vmem:[#allocation2 + $0x8] sm:$0xff]
        %v629 = vld [vmem:[#allocation2 + $0x10] sm:$0xff]
        %v630 = vld [vmem:[#allocation2 + $0x18] sm:$0xff]
        %v631 = vld [vmem:[#allocation2 + $0x20] sm:$0xff]
        %v632 = vld [vmem:[#allocation2 + $0x28] sm:$0xff]
        %637 = vrot.lane.b32.xlu0 %v627, 127
        %v638 = vpop.permute.xlu0 %637
        %639 = vrot.lane.b32.xlu0 %v628, 127
        %v640 = vpop.permute.xlu0 %639
        %641 = vrot.lane.b32.xlu0 %v630, 127
        %v642 = vpop.permute.xlu0 %641
        %643 = vrot.lane.b32.xlu0 %v631, 127
        %v644 = vpop.permute.xlu0 %643
        %v645 = vsel %vm379, %v638, %v640
        %v646 = vsel %vm379, %v642, %v644
        %647 = vrot.lane.b32.xlu0 %v627, 126
        %v648 = vpop.permute.xlu0 %647
        %649 = vrot.lane.b32.xlu0 %v628, 126
        %v650 = vpop.permute.xlu0 %649
        %651 = vrot.lane.b32.xlu0 %v630, 126
        %v652 = vpop.permute.xlu0 %651
        %653 = vrot.lane.b32.xlu0 %v631, 126
        %v654 = vpop.permute.xlu0 %653
        %v655 = vsel %vm390, %v648, %v650
        %v656 = vsel %vm390, %v652, %v654
        %657 = vrot.lane.b32.xlu0 %v628, 125
        %v658 = vpop.permute.xlu0 %657
        %659 = vrot.lane.b32.xlu0 %v631, 125
        %v660 = vpop.permute.xlu0 %659
        %663 = vrot.lane.b32.xlu0 %v628, 124
        %v664 = vpop.permute.xlu0 %663
        %665 = vrot.lane.b32.xlu0 %v629, 124
        %v666 = vpop.permute.xlu0 %665
        %667 = vrot.lane.b32.xlu0 %v631, 124
        %v668 = vpop.permute.xlu0 %667
        %669 = vrot.lane.b32.xlu0 %v632, 124
        %v670 = vpop.permute.xlu0 %669
        %v671 = vsel %vm407, %v664, %v666
        %v672 = vsel %vm407, %v668, %v670
        %673 = vrot.lane.b32.xlu0 %v628, 123
        %v674 = vpop.permute.xlu0 %673
        %675 = vrot.lane.b32.xlu0 %v629, 123
        %v676 = vpop.permute.xlu0 %675
        %677 = vrot.lane.b32.xlu0 %v631, 123
        %v678 = vpop.permute.xlu0 %677
        %679 = vrot.lane.b32.xlu0 %v632, 123
        %v680 = vpop.permute.xlu0 %679
        %v681 = vsel %vm418, %v674, %v676
        %v682 = vsel %vm418, %v678, %v680
        %683 = vrot.lane.b32.xlu0 %v628, 122
        %v684 = vpop.permute.xlu0 %683
        %685 = vrot.lane.b32.xlu0 %v629, 122
        %v686 = vpop.permute.xlu0 %685
        %687 = vrot.lane.b32.xlu0 %v631, 122
        %v688 = vpop.permute.xlu0 %687
        %689 = vrot.lane.b32.xlu0 %v632, 122
        %v690 = vpop.permute.xlu0 %689
        %v691 = vsel %vm429, %v684, %v686
        %v692 = vsel %vm429, %v688, %v690
        %693 = vrot.lane.b32.xlu0 %v628, 121
        %v694 = vpop.permute.xlu0 %693
        %695 = vrot.lane.b32.xlu0 %v629, 121
        %v696 = vpop.permute.xlu0 %695
        %697 = vrot.lane.b32.xlu0 %v631, 121
        %v698 = vpop.permute.xlu0 %697
        %699 = vrot.lane.b32.xlu0 %v632, 121
        %v700 = vpop.permute.xlu0 %699
        %v701 = vsel %vm440, %v694, %v696
        %v702 = vsel %vm440, %v698, %v700
        %v703 = vld [vmem:[%s4] sm:$0xff]
        %v704 = vld [vmem:[%s4 + $0x8] sm:$0xff]
        %v705 = vld [vmem:[%s5] sm:$0xff]
        %v706 = vld [vmem:[%s5 + $0x8] sm:$0xff]
        %708 = vset.pattern.permute.xlu0 0
        %709 = vperm.xlu0 %708, %v705
        %v710 = vpop.permute.xlu0 %709
        %713 = vset.pattern.permute.xlu0 0
        %714 = vperm.xlu0 %713, %v706
        %v715 = vpop.permute.xlu0 %714
        %717 = vrot.lane.b32.xlu0 %v627, 3
        %v718 = vpop.permute.xlu0 %717
        %719 = vrot.lane.b32.xlu0 %v628, 3
        %v720 = vpop.permute.xlu0 %719
        %721 = vrot.lane.b32.xlu0 %v630, 3
        %v722 = vpop.permute.xlu0 %721
        %723 = vrot.lane.b32.xlu0 %v631, 3
        %v724 = vpop.permute.xlu0 %723
        %725 = vrot.lane.b32.xlu0 %v645, 3
        %v726 = vpop.permute.xlu0 %725
        %727 = vrot.lane.b32.xlu0 %v640, 3
        %v728 = vpop.permute.xlu0 %727
        %729 = vrot.lane.b32.xlu0 %v646, 3
        %v730 = vpop.permute.xlu0 %729
        %731 = vrot.lane.b32.xlu0 %v644, 3
        %v732 = vpop.permute.xlu0 %731
        %733 = vrot.lane.b32.xlu0 %v655, 3
        %v734 = vpop.permute.xlu0 %733
        %735 = vrot.lane.b32.xlu0 %v650, 3
        %v736 = vpop.permute.xlu0 %735
        %737 = vrot.lane.b32.xlu0 %v656, 3
        %v738 = vpop.permute.xlu0 %737
        %739 = vrot.lane.b32.xlu0 %v654, 3
        %v740 = vpop.permute.xlu0 %739
        %741 = vrot.lane.b32.xlu0 %v658, 3
        %v742 = vpop.permute.xlu0 %741
        %743 = vrot.lane.b32.xlu0 %v660, 3
        %v744 = vpop.permute.xlu0 %743
        %745 = vrot.lane.b32.xlu0 %v664, 3
        %v746 = vpop.permute.xlu0 %745
        %747 = vrot.lane.b32.xlu0 %v671, 3
        %v748 = vpop.permute.xlu0 %747
        %749 = vrot.lane.b32.xlu0 %v668, 3
        %v750 = vpop.permute.xlu0 %749
        %751 = vrot.lane.b32.xlu0 %v672, 3
        %v752 = vpop.permute.xlu0 %751
        %753 = vrot.lane.b32.xlu0 %v674, 3
        %v754 = vpop.permute.xlu0 %753
        %755 = vrot.lane.b32.xlu0 %v681, 3
        %v756 = vpop.permute.xlu0 %755
        %757 = vrot.lane.b32.xlu0 %v678, 3
        %v758 = vpop.permute.xlu0 %757
        %759 = vrot.lane.b32.xlu0 %v682, 3
        %v760 = vpop.permute.xlu0 %759
        %761 = vrot.lane.b32.xlu0 %v684, 3
        %v762 = vpop.permute.xlu0 %761
        %763 = vrot.lane.b32.xlu0 %v691, 3
        %v764 = vpop.permute.xlu0 %763
        %765 = vrot.lane.b32.xlu0 %v688, 3
        %v766 = vpop.permute.xlu0 %765
        %767 = vrot.lane.b32.xlu0 %v692, 3
        %v768 = vpop.permute.xlu0 %767
        %769 = vrot.lane.b32.xlu0 %v694, 3
        %v770 = vpop.permute.xlu0 %769
        %771 = vrot.lane.b32.xlu0 %v701, 3
        %v772 = vpop.permute.xlu0 %771
        %773 = vrot.lane.b32.xlu0 %v698, 3
        %v774 = vpop.permute.xlu0 %773
        %775 = vrot.lane.b32.xlu0 %v702, 3
        %v776 = vpop.permute.xlu0 %775
        %v777 = vsel %vm517, %v718, %v720
        %v778 = vsel %vm517, %v722, %v724
        %v779 = vsel %vm517, %v726, %v728
        %v780 = vsel %vm517, %v730, %v732
        %v781 = vsel %vm517, %v734, %v736
        %v782 = vsel %vm517, %v738, %v740
        %v783 = vsel %vm517, %v746, %v748
        %v784 = vsel %vm517, %v750, %v752
        %v785 = vsel %vm517, %v754, %v756
        %v786 = vsel %vm517, %v758, %v760
        %v787 = vsel %vm517, %v762, %v764
        %v788 = vsel %vm517, %v766, %v768
        %v789 = vsel %vm517, %v770, %v772
        %v790 = vsel %vm517, %v774, %v776
        %807 = vmatprep.subr.mxu0 0.0
        %808 = vmatpush1.msra.mxu0 %v790
        %809 = vmatprep.subr.mxu0 0.0
        %810 = vmatpush1.msra.mxu0 %v789
        %811 = vmatprep.subr.mxu0 0.0
        %812 = vmatpush1.msra.mxu0 %v788
        %813 = vmatprep.subr.mxu0 0.0
        %814 = vmatpush1.msra.mxu0 %v787
        %815 = vmatprep.subr.mxu0 0.0
        %816 = vmatpush1.msra.mxu0 %v786
        %817 = vmatprep.subr.mxu0 0.0
        %818 = vmatpush1.msra.mxu0 %v785
        %819 = vmatprep.subr.mxu0 0.0
        %820 = vmatpush1.msra.mxu0 %v784
        %821 = vmatprep.subr.mxu0 0.0
        %822 = vmatpush1.msra.mxu0 %v783
        %823 = vmatprep.subr.mxu0 0.0
        %824 = vmatpush1.msra.mxu0 %v744
        %825 = vmatprep.subr.mxu0 0.0
        %826 = vmatpush1.msra.mxu0 %v742
        %827 = vmatprep.subr.mxu0 0.0
        %828 = vmatpush1.msra.mxu0 %v782
        %829 = vmatprep.subr.mxu0 0.0
        %830 = vmatpush1.msra.mxu0 %v781
        %831 = vmatprep.subr.mxu0 0.0
        %832 = vmatpush1.msra.mxu0 %v780
        %833 = vmatprep.subr.mxu0 0.0
        %834 = vmatpush1.msra.mxu0 %v779
        %835 = vmatprep.subr.mxu0 0.0
        %836 = vmatpush1.msra.mxu0 %v778
        %837 = vmatprep.subr.mxu0 0.0
        %838 = vmatpush1.msra.mxu0 %v777
        %839 = vmatprep.subr.mxu0 0.0
        %840 = vmatpush2.msra.mxu0 0.0
        %841 = vmatprep.subr.mxu0 0.0
        %842 = vmatpush2.msra.mxu0 0.0
        %843 = vmatprep.subr.mxu0 0.0
        %844 = vmatpush2.msra.mxu0 0.0
        %845 = vmatprep.subr.mxu0 0.0
        %846 = vmatpush2.msra.mxu0 0.0
        %847 = vmatprep.subr.mxu0 0.0
        %848 = vmatpush2.msra.mxu0 0.0
        %849 = vmatprep.subr.mxu0 0.0
        %850 = vmatpush2.msra.mxu0 0.0
        %851 = vmatprep.subr.mxu0 0.0
        %852 = vmatpush2.msra.mxu0 0.0
        %853 = vmatprep.subr.mxu0 0.0
        %854 = vmatpush2.msra.mxu0 0.0
        %855 = vmatprep.subr.mxu0 0.0
        %856 = vmatpush2.msra.mxu0 0.0
        %857 = vmatprep.subr.mxu0 0.0
        %858 = vmatpush2.msra.mxu0 0.0
        %859 = vmatprep.subr.mxu0 0.0
        %860 = vmatpush2.msra.mxu0 0.0
        %861 = vmatprep.subr.mxu0 0.0
        %862 = vmatpush2.msra.mxu0 0.0
        %863 = vmatprep.subr.mxu0 0.0
        %864 = vmatpush2.msra.mxu0 0.0
        %865 = vmatprep.subr.mxu0 0.0
        %866 = vmatpush2.msra.mxu0 0.0
        %867 = vmatprep.subr.mxu0 0.0
        %868 = vmatpush2.msra.mxu0 0.0
        %869 = vmatprep.subr.mxu0 0.0
        %870 = vmatpush2.msra.mxu0 0.0
        %871 = vmatprep.mubr.f32.mxu0 0.0
        %872 = vmatmul.mubr.f32.gmra.mxu0 %v703
        %v873 = vpop.f32.mrf.mxu0
        %v874 = vadd.f32 %v710, %v873
        %v875 = vpop.f32.mrf.mxu0
        %876 = vmatprep.mubr.f32.mxu0 0.0
        %877 = vmatmul.mubr.f32.gmra.mxu0 %v704
        %v878 = vpop.f32.mrf.mxu0
        %v879 = vadd.f32 %v715, %v878
        %v880 = vpop.f32.mrf.mxu0
        %881 = vdwg.mxu0
        %v882 = vmax.f32 %v874, 0.0
        %v883 = vmax.f32 %v879, 0.0
        %v884 = vld [vmem:[%s6] sm:$0xff]
        %vm885 = vcmask 130048
        %v887 = vsel %vm885, %v884, 0
        %889 = vmatprep.subr.mxu0 0.0
        %890 = vmatpush1.msra.mxu0 0.0
        %891 = vmatprep.subr.mxu0 0.0
        %892 = vmatpush1.msra.mxu0 0.0
        %893 = vmatprep.subr.mxu0 0.0
        %894 = vmatpush1.msra.mxu0 0.0
        %895 = vmatprep.subr.mxu0 0.0
        %896 = vmatpush1.msra.mxu0 0.0
        %897 = vmatprep.subr.mxu0 0.0
        %898 = vmatpush1.msra.mxu0 0.0
        %899 = vmatprep.subr.mxu0 0.0
        %900 = vmatpush1.msra.mxu0 0.0
        %901 = vmatprep.subr.mxu0 0.0
        %902 = vmatpush1.msra.mxu0 0.0
        %903 = vmatprep.subr.mxu0 0.0
        %904 = vmatpush1.msra.mxu0 0.0
        %905 = vmatprep.subr.mxu0 0.0
        %906 = vmatpush1.msra.mxu0 0.0
        %907 = vmatprep.subr.mxu0 0.0
        %908 = vmatpush1.msra.mxu0 0.0
        %909 = vmatprep.subr.mxu0 0.0
        %910 = vmatpush1.msra.mxu0 0.0
        %911 = vmatprep.subr.mxu0 0.0
        %912 = vmatpush1.msra.mxu0 0.0
        %913 = vmatprep.subr.mxu0 0.0
        %914 = vmatpush1.msra.mxu0 0.0
        %915 = vmatprep.subr.mxu0 0.0
        %916 = vmatpush1.msra.mxu0 0.0
        %917 = vmatprep.subr.mxu0 0.0
        %918 = vmatpush1.msra.mxu0 %v883
        %919 = vmatprep.subr.mxu0 0.0
        %920 = vmatpush1.msra.mxu0 %v882
        %921 = vmatprep.subr.mxu0 0.0
        %922 = vmatpush2.msra.mxu0 0.0
        %923 = vmatprep.subr.mxu0 0.0
        %924 = vmatpush2.msra.mxu0 0.0
        %925 = vmatprep.subr.mxu0 0.0
        %926 = vmatpush2.msra.mxu0 0.0
        %927 = vmatprep.subr.mxu0 0.0
        %928 = vmatpush2.msra.mxu0 0.0
        %929 = vmatprep.subr.mxu0 0.0
        %930 = vmatpush2.msra.mxu0 0.0
        %931 = vmatprep.subr.mxu0 0.0
        %932 = vmatpush2.msra.mxu0 0.0
        %933 = vmatprep.subr.mxu0 0.0
        %934 = vmatpush2.msra.mxu0 0.0
        %935 = vmatprep.subr.mxu0 0.0
        %936 = vmatpush2.msra.mxu0 0.0
        %937 = vmatprep.subr.mxu0 0.0
        %938 = vmatpush2.msra.mxu0 0.0
        %939 = vmatprep.subr.mxu0 0.0
        %940 = vmatpush2.msra.mxu0 0.0
        %941 = vmatprep.subr.mxu0 0.0
        %942 = vmatpush2.msra.mxu0 0.0
        %943 = vmatprep.subr.mxu0 0.0
        %944 = vmatpush2.msra.mxu0 0.0
        %945 = vmatprep.subr.mxu0 0.0
        %946 = vmatpush2.msra.mxu0 0.0
        %947 = vmatprep.subr.mxu0 0.0
        %948 = vmatpush2.msra.mxu0 0.0
        %949 = vmatprep.subr.mxu0 0.0
        %950 = vmatpush2.msra.mxu0 0.0
        %951 = vmatprep.subr.mxu0 0.0
        %952 = vmatpush2.msra.mxu0 0.0
        %953 = vmatprep.mubr.f32.mxu0 0.0
        %954 = vmatmul.mubr.f32.gmra.mxu0 %v887
        %v955 = vpop.f32.mrf.mxu0
        %v956 = vadd.f32 0.0, %v955
        %v957 = vpop.f32.mrf.mxu0
        %958 = vdwg.mxu0
        %959 = vadd.xlane.f32.xlu0 %v956
        %v960 = vpop.xlane.xlu0 %959
        %v961 = vrcp.pop 128.0
        %v962 = vmul.f32 %v960, %v961
        %v963 = vld [vmem:[%s7] sm:$0xff]
        %v964 = vadd.f32 %v962, %v963
        %vm965 = vcmask 7168
        %966 = vst.msk [vmem:[%s340] sm:$0xff] %vm965, %v964
        %p967 = scmp.lt.s32.totalorder %s22, 1
        %s968 = scalar_select %p967, %s22, 1
        %s969 = smul.addr %s968, 8
        %s970 = scalar_lea.vmem %s8, %s969
        // Predicated region
        $region57: #{custom_model_no_align.1} parent=51 // pred_check
          %p971 = pneg %p218
        $region58: #{custom_model_no_align.1} parent=51 // pred_check_branch
          %973 = sbr.rel (%p971) target = $region60
        $region59: #{custom_model_no_align.1} parent=51 // pred_region
          _
        $region60: #{custom_model_no_align.1} parent=51 // pred_fallthru
          _
      $region52: #{custom_model_no_align.1} parent=5 // pred_fallthru
        _
      %p974 = scmp.le.s32.totalorder 2, %s17
      // Predicated region
      $region61: #{custom_model_no_align.1} parent=5 // pred_check
        %p975 = pneg %p974
      $region62: #{custom_model_no_align.1} parent=5 // pred_check_branch
        %977 = sbr.rel (%p975) target = $region64
      $region63: #{custom_model_no_align.1} parent=5 // pred_region
        %s978 = ssub.s32 %s17, 2
        // Predicated region
        $region65: #{custom_model_no_align.1} parent=63 // pred_check
          %p979 = pneg %p224
        $region66: #{custom_model_no_align.1} parent=63 // pred_check_branch
          %981 = sbr.rel (%p979) target = $region68
        $region67: #{custom_model_no_align.1} parent=63 // pred_region
          %p982 = scmp.lt.s32.totalorder %s23, 1
          %s983 = scalar_select %p982, %s23, 1
          %s984 = smul.addr %s983, 8
          %s985 = scalar_lea.vmem %s8, %s984
        $region68: #{custom_model_no_align.1} parent=63 // pred_fallthru
          _
      $region64: #{custom_model_no_align.1} parent=5 // pred_fallthru
        _
    $region6: #{custom_model_no_align.1} parent=1 // loop_footer
      %s21 = sadd.s32 1, %s17
    $region7: #{custom_model_no_align.1} parent=1 // loop_footer_branch
      %16 = sbr.rel target = $region3
    $region8: #{custom_model_no_align.1} parent=1 // loop_exit
      _
    %986 = vsyncpa [#allocation4], 1
    %s987 = scalar_lea.sflag [#allocation4], 1
    %988 = vsyncpa %s987, 1

</llo_original>
